<compile_context>
chip_gen: v5e
topology: v5e:2x2
jax: 0.10.0
libtpu: 0.0.40
codegen_flags: <defaults>
</compile_context>

<pallas_src>
import jax
import jax.numpy as jnp
from jax.experimental import pallas as pl
from jax.experimental.pallas import tpu as pltpu

_LANE = 128   # vreg lane width
_SUBLANE = 8  # f32 sublane count


def _round_up(n, m):
    return ((n + m - 1) // m) * m


def mlp_kernel(x_ref, w1_ref, b1_ref, w2_ref, b2_ref, o_ref):
    # Two MXU matmuls + VPU bias/ReLU; weights stay VMEM-resident across steps.
    x = x_ref[...]                                        # (TB, D_in)
    h = jnp.dot(x, w1_ref[...],
                preferred_element_type=jnp.float32)       # (TB, H_pad)
    h = jnp.maximum(h + b1_ref[...], 0.0)                 # bias + ReLU (f32 VPU)
    y = jnp.dot(h, w2_ref[...],
                preferred_element_type=jnp.float32)       # (TB, D_out)
    o_ref[...] = (y + b2_ref[...]).astype(o_ref.dtype)


def prepare_params(w1, b1, w2, b2):
    """Pad the hidden dim to 128 lanes ONCE, outside the per-call hot path.

    Zero padding is exact: padded hidden lanes are ReLU(0)=0 and multiply
    zero rows of w2_p, so they contribute nothing to the outputs.
    """
    D_in, H = w1.shape
    D_out = w2.shape[1]
    H_pad = _round_up(H, _LANE)
    w1_p = jnp.zeros((D_in, H_pad), jnp.float32).at[:, :H].set(w1)
    b1_p = jnp.zeros((1, H_pad), jnp.float32).at[:, :H].set(jnp.reshape(b1, (1, H)))
    w2_p = jnp.zeros((H_pad, D_out), jnp.float32).at[:H, :].set(w2)  # true width
    b2_p = jnp.reshape(b2, (1, D_out)).astype(jnp.float32)
    return w1_p, b1_p, w2_p, b2_p


def simple_model_forward(x, params, *, block_rows=4096):
    """x: (B, D_in) f32; params from prepare_params(). Returns (B, D_out) f32."""
    w1_p, b1_p, w2_p, b2_p = params
    B, D_in = x.shape
    H_pad = w1_p.shape[1]
    D_out = w2_p.shape[1]

    # Sublane-only batch padding (cheap; skipped entirely when B % 8 == 0).
    B_sub = _round_up(B, _SUBLANE)
    if B_sub != B:
        x = jnp.pad(x, ((0, B_sub - B), (0, 0)))

    # Batch row tile: as large as the cap allows, but keep >= 2 grid steps
    # when the batch permits so the "parallel" axis can use both v7x cores.
    if B_sub <= _SUBLANE:
        tb = _SUBLANE
    else:
        tb = min(block_rows, _round_up(pl.cdiv(B_sub, 2), _SUBLANE))
    # Last block may overhang B_sub: those rows are independent garbage and
    # their output writes are masked, so correctness is unaffected.
    grid = (pl.cdiv(B_sub, tb),)

    cost = pl.CostEstimate(
        flops=2 * B_sub * (D_in * H_pad + H_pad * D_out),
        transcendentals=0,
        bytes_accessed=4 * (B_sub * D_in + B_sub * D_out
                            + D_in * H_pad + H_pad + H_pad * D_out + D_out),
    )

    out = pl.pallas_call(
        mlp_kernel,
        out_shape=jax.ShapeDtypeStruct((B_sub, D_out), jnp.float32),
        grid=grid,
        in_specs=[
            # x streams per batch tile.
            pl.BlockSpec((tb, D_in), lambda i: (i, 0)),
            # Weights / biases: same block every step -> VMEM-resident, no re-DMA.
            pl.BlockSpec((D_in, H_pad), lambda i: (0, 0)),
            pl.BlockSpec((1, H_pad), lambda i: (0, 0)),
            pl.BlockSpec((H_pad, D_out), lambda i: (0, 0)),
            pl.BlockSpec((1, D_out), lambda i: (0, 0)),
        ],
        # Unpadded output lanes (D_out equals the full array dim -> legal).
        out_specs=pl.BlockSpec((tb, D_out), lambda i: (i, 0)),
        compiler_params=pltpu.CompilerParams(
            dimension_semantics=("parallel",),
        ),
        cost_estimate=cost,
    )(x, w1_p, b1_p, w2_p, b2_p)

    return out if B_sub == B else out[:B]


def init_params(key, input_dim=10, hidden_dim=5, output_dim=1):
    """Deterministic init mimicking nn.Linear's U(-1/sqrt(fan_in), 1/sqrt(fan_in))."""
    k1, k2, k3, k4 = jax.random.split(key, 4)
    bound1 = 1.0 / jnp.sqrt(input_dim)
    bound2 = 1.0 / jnp.sqrt(hidden_dim)
    w1 = jax.random.uniform(k1, (input_dim, hidden_dim), jnp.float32, -bound1, bound1)
    b1 = jax.random.uniform(k2, (1, hidden_dim), jnp.float32, -bound1, bound1)
    w2 = jax.random.uniform(k3, (hidden_dim, output_dim), jnp.float32, -bound2, bound2)
    b2 = jax.random.uniform(k4, (1, output_dim), jnp.float32, -bound2, bound2)
    return w1, b1, w2, b2


def _reference(x, w1, b1, w2, b2):
    return jnp.maximum(x @ w1 + b1, 0.0) @ w2 + b2


if __name__ == "__main__":
    key = jax.random.PRNGKey(0)
    k_x1, k_x2, k_p = jax.random.split(key, 3)

    input_dim, hidden_dim, output_dim = 10, 5, 1
    w1, b1, w2, b2 = init_params(k_p, input_dim, hidden_dim, output_dim)
    params = prepare_params(w1, b1, w2, b2)   # padded once, outside hot path

    fwd = jax.jit(simple_model_forward)

    # Small-batch case (matches the original test usage): single grid step.
    x_small = jax.random.normal(k_x1, (8, input_dim), jnp.float32)
    out_small = jax.block_until_ready(fwd(x_small, params))
    ref_small = _reference(x_small, w1, b1, w2, b2)
    assert out_small.shape == (8, output_dim)
    assert jnp.allclose(out_small, ref_small, atol=1e-5, rtol=1e-5)

    # Larger batch: 2 grid steps with resident weights and an overhanging
    # final block (1000 rows, 504-row tiles) — exercises masked tail writes.
    x_big = jax.random.normal(k_x2, (1000, input_dim), jnp.float32)
    out_big = jax.block_until_ready(fwd(x_big, params))
    ref_big = _reference(x_big, w1, b1, w2, b2)
    assert out_big.shape == (1000, output_dim)
    assert jnp.allclose(out_big, ref_big, atol=1e-5, rtol=1e-5)

    print("KERNEL_OK")
</pallas_src>

<mosaic_0001>
module attributes {stable_mosaic.version = 11 : i64} {
  func.func @mlp_kernel(%arg0: i32, %arg1: memref<8x10xf32, #tpu.memory_space<vmem>>, %arg2: memref<10x128xf32, #tpu.memory_space<vmem>>, %arg3: memref<1x128xf32, #tpu.memory_space<vmem>>, %arg4: memref<128x1xf32, #tpu.memory_space<vmem>>, %arg5: memref<1x1xf32, #tpu.memory_space<vmem>>, %arg6: memref<8x1xf32, #tpu.memory_space<vmem>>) attributes {dimension_semantics = [#tpu.dimension_semantics<parallel>], iteration_bounds = array<i64: 1>, scalar_prefetch = 0 : i64, scratch_operands = 0 : i64, tpu.core_type = #tpu.core_type<tc>, window_params = [{transform_indices = @transform_0, window_bounds = array<i64: 8, 10>}, {pipeline_mode = #tpu.pipeline_mode<synchronous>, transform_indices = @transform_1, window_bounds = array<i64: 10, 128>}, {pipeline_mode = #tpu.pipeline_mode<synchronous>, transform_indices = @transform_2, window_bounds = array<i64: 1, 128>}, {pipeline_mode = #tpu.pipeline_mode<synchronous>, transform_indices = @transform_3, window_bounds = array<i64: 128, 1>}, {pipeline_mode = #tpu.pipeline_mode<synchronous>, transform_indices = @transform_4, window_bounds = array<i64: 1, 1>}, {transform_indices = @transform_5, window_bounds = array<i64: 8, 1>}]} {
    %c0 = arith.constant 0 : index
    %c0_0 = arith.constant 0 : index
    %0 = vector.load %arg1[%c0, %c0_0] : memref<8x10xf32, #tpu.memory_space<vmem>>, vector<8x10xf32>
    %c0_1 = arith.constant 0 : index
    %c0_2 = arith.constant 0 : index
    %1 = vector.load %arg2[%c0_1, %c0_2] : memref<10x128xf32, #tpu.memory_space<vmem>>, vector<10x128xf32>
    %cst = arith.constant dense<0.000000e+00> : vector<8x128xf32>
    %2 = tpu.matmul %0, %1, %cst {dimension_numbers = #tpu.dot_dimension_numbers<[1], [0], [0], [1], [0, 0, 1, 1], [], []>} : vector<8x10xf32>, vector<10x128xf32>, vector<8x128xf32> -> vector<8x128xf32>
    %c0_3 = arith.constant 0 : index
    %c0_4 = arith.constant 0 : index
    %3 = vector.load %arg3[%c0_3, %c0_4] : memref<1x128xf32, #tpu.memory_space<vmem>>, vector<1x128xf32>
    %4 = vector.broadcast %3 : vector<1x128xf32> to vector<8x128xf32>
    %5 = arith.addf %2, %4 : vector<8x128xf32>
    %cst_5 = arith.constant 0.000000e+00 : f32
    %6 = vector.broadcast %cst_5 : f32 to vector<8x128xf32>
    %7 = arith.maximumf %5, %6 : vector<8x128xf32>
    %c0_6 = arith.constant 0 : index
    %c0_7 = arith.constant 0 : index
    %8 = vector.load %arg4[%c0_6, %c0_7] : memref<128x1xf32, #tpu.memory_space<vmem>>, vector<128x1xf32>
    %cst_8 = arith.constant dense<0.000000e+00> : vector<8x1xf32>
    %9 = tpu.matmul %7, %8, %cst_8 {dimension_numbers = #tpu.dot_dimension_numbers<[1], [0], [0], [1], [0, 0, 1, 1], [], []>} : vector<8x128xf32>, vector<128x1xf32>, vector<8x1xf32> -> vector<8x1xf32>
    %c0_9 = arith.constant 0 : index
    %c0_10 = arith.constant 0 : index
    %10 = vector.load %arg5[%c0_9, %c0_10] : memref<1x1xf32, #tpu.memory_space<vmem>>, vector<1x1xf32>
    %11 = vector.broadcast %10 : vector<1x1xf32> to vector<8x1xf32>
    %12 = arith.addf %9, %11 : vector<8x1xf32>
    %c0_11 = arith.constant 0 : index
    %c0_12 = arith.constant 0 : index
    %13 = vector.load %arg6[%c0_11, %c0_12] : memref<8x1xf32, #tpu.memory_space<vmem>>, vector<8x1xf32>
    tpu.vector_store %arg6[%c0_11, %c0_12], %12 {strides = array<i32>} : memref<8x1xf32, #tpu.memory_space<vmem>>, vector<8x1xf32>,
    return
  }
  func.func @transform_0(%arg0: i32) -> (i32, i32) {
    %c0_i32 = arith.constant 0 : i32
    %c0_i32_0 = arith.constant 0 : i32
    return %arg0, %c0_i32 : i32, i32
  }
  func.func @transform_1(%arg0: i32) -> (i32, i32) {
    %c0_i32 = arith.constant 0 : i32
    %c0_i32_0 = arith.constant 0 : i32
    %c0_i32_1 = arith.constant 0 : i32
    return %c0_i32, %c0_i32_0 : i32, i32
  }
  func.func @transform_2(%arg0: i32) -> (i32, i32) {
    %c0_i32 = arith.constant 0 : i32
    %c0_i32_0 = arith.constant 0 : i32
    %c0_i32_1 = arith.constant 0 : i32
    return %c0_i32, %c0_i32_0 : i32, i32
  }
  func.func @transform_3(%arg0: i32) -> (i32, i32) {
    %c0_i32 = arith.constant 0 : i32
    %c0_i32_0 = arith.constant 0 : i32
    %c0_i32_1 = arith.constant 0 : i32
    return %c0_i32, %c0_i32_0 : i32, i32
  }
  func.func @transform_4(%arg0: i32) -> (i32, i32) {
    %c0_i32 = arith.constant 0 : i32
    %c0_i32_0 = arith.constant 0 : i32
    %c0_i32_1 = arith.constant 0 : i32
    return %c0_i32, %c0_i32_0 : i32, i32
  }
  func.func @transform_5(%arg0: i32) -> (i32, i32) {
    %c0_i32 = arith.constant 0 : i32
    %c0_i32_0 = arith.constant 0 : i32
    return %arg0, %c0_i32 : i32, i32
  }
}

</mosaic_0001>

<llo_original>
// kernel: simple_model_forward.1
$region0: #{simple_model_forward.1}
  #allocation0 [shape = 'u32[]', space=smem, size = 0x4, offset = 0x4, fixed_abs, tag = 'smem constant byte address 0x4 - core index']
  #allocation1 [shape = 'u32[72,128]{1,0:T(1,128)}', space=vmem, size = 0x9000, scoped, tag = 'internal scratch']
  #allocation2 [shape = 'f32[1,1]{1,0:T(1,128)S(1)}', space=vmem, size = 0x200, scoped, tag = 'scoped memory for simple_model_forward.1']
  %s0 = inlined_call_operand.vmem [shape: f32[8,10], index: 0, kind: input, shape index: {}]
  %s1 = inlined_call_operand.vmem [shape: f32[10,128], index: 1, kind: input, shape index: {}]
  %s2 = inlined_call_operand.vmem [shape: f32[1,128], index: 2, kind: input, shape index: {}]
  %s3 = inlined_call_operand.vmem [shape: f32[128,1], index: 3, kind: input, shape index: {}]
  %s4 = inlined_call_operand.<no memory space> [shape: f32[1,1], index: 4, kind: input, shape index: {}]
  %s5 = inlined_call_operand.vmem [shape: f32[8,1], index: 5, kind: output, shape index: {}]
  %s6 = sld [smem:[#allocation0]]
  $region30: #{simple_model_forward.1} parent=0
    _
  %s8 = ssub.s32 1, %s6
  %s9 = scalar_select 0, %s8, %s6
  %v10 = vstv %s4
  %11 = vst [vmem:[#allocation2] sm:$0x1] %v10
  // Predicated region
  $region2: #{simple_model_forward.1} parent=0 // pred_check
    _
  $region3: #{simple_model_forward.1} parent=0 // pred_check_branch
    %13 = sbr.rel (0) target = $region5
  $region4: #{simple_model_forward.1} parent=0 // pred_region
    _
  $region5: #{simple_model_forward.1} parent=0 // pred_fallthru
    _
  // Predicated region
  $region6: #{simple_model_forward.1} parent=0 // pred_check
    _
  $region7: #{simple_model_forward.1} parent=0 // pred_check_branch
    %15 = sbr.rel (0) target = $region9
  $region8: #{simple_model_forward.1} parent=0 // pred_region
    _
  $region9: #{simple_model_forward.1} parent=0 // pred_fallthru
    _
  // Predicated region
  $region10: #{simple_model_forward.1} parent=0 // pred_check
    _
  $region11: #{simple_model_forward.1} parent=0 // pred_check_branch
    %17 = sbr.rel (0) target = $region13
  $region12: #{simple_model_forward.1} parent=0 // pred_region
    _
  $region13: #{simple_model_forward.1} parent=0 // pred_fallthru
    _
  // Predicated region
  $region14: #{simple_model_forward.1} parent=0 // pred_check
    _
  $region15: #{simple_model_forward.1} parent=0 // pred_check_branch
    %19 = sbr.rel (0) target = $region17
  $region16: #{simple_model_forward.1} parent=0 // pred_region
    _
  $region17: #{simple_model_forward.1} parent=0 // pred_fallthru
    _
  // Predicated region
  $region18: #{simple_model_forward.1} parent=0 // pred_check
    _
  $region19: #{simple_model_forward.1} parent=0 // pred_check_branch
    %21 = sbr.rel (0) target = $region21
  $region20: #{simple_model_forward.1} parent=0 // pred_region
    _
  $region21: #{simple_model_forward.1} parent=0 // pred_fallthru
    _
  %v22 = vld [vmem:[%s0] sm:$0xff]
  %v23 = vld [vmem:[%s1] sm:$0xff]
  %v24 = vld [vmem:[%s1 + $0x8] sm:$0x3]
  %v25 = vld [vmem:[%s2] sm:$0x1]
  %v27 = vperm.slane %v25, 0
  %vm29 = vcmask 80896
  %v31 = vsel %vm29, %v22, 0
  %vm33 = vcmask 1041408
  %v35 = vsel %vm33, %v24, 0
  %37 = vmatpush.msra.mxu0 0.0
  %38 = vmatpush.msra.mxu0 0.0
  %39 = vmatpush.msra.mxu0 0.0
  %40 = vmatpush.msra.mxu0 0.0
  %41 = vmatpush.msra.mxu0 0.0
  %42 = vmatpush.msra.mxu0 0.0
  %43 = vmatpush.msra.mxu0 0.0
  %44 = vmatpush.msra.mxu0 0.0
  %45 = vmatpush.msra.mxu0 0.0
  %46 = vmatpush.msra.mxu0 0.0
  %47 = vmatpush.msra.mxu0 0.0
  %48 = vmatpush.msra.mxu0 0.0
  %49 = vmatpush.msra.mxu0 0.0
  %50 = vmatpush.msra.mxu0 0.0
  %51 = vmatpush.msra.mxu0 %v35
  %52 = vmatpush.msra.mxu0 %v23
  %53 = vmatmul.f32.gmra.mxu0 %v31
  %v54 = vpop.f32.mrf.mxu0
  %v55 = vadd.f32 %v27, %v54
  %56 = vdwg.mxu0
  %v57 = vmax.f32 %v55, 0.0
  %v58 = vld [vmem:[%s3] sm:$0xff]
  %v59 = vld [vmem:[%s3 + $0x8] sm:$0xff]
  %v60 = vld [vmem:[%s3 + $0x10] sm:$0xff]
  %v61 = vld [vmem:[%s3 + $0x18] sm:$0xff]
  %v62 = vld [vmem:[%s3 + $0x20] sm:$0xff]
  %v63 = vld [vmem:[%s3 + $0x28] sm:$0xff]
  %v64 = vld [vmem:[%s3 + $0x30] sm:$0xff]
  %v65 = vld [vmem:[%s3 + $0x38] sm:$0xff]
  %v66 = vld [vmem:[%s3 + $0x40] sm:$0xff]
  %v67 = vld [vmem:[%s3 + $0x48] sm:$0xff]
  %v68 = vld [vmem:[%s3 + $0x50] sm:$0xff]
  %v69 = vld [vmem:[%s3 + $0x58] sm:$0xff]
  %v70 = vld [vmem:[%s3 + $0x60] sm:$0xff]
  %v71 = vld [vmem:[%s3 + $0x68] sm:$0xff]
  %v72 = vld [vmem:[%s3 + $0x70] sm:$0xff]
  %v73 = vld [vmem:[%s3 + $0x78] sm:$0xff]
  %v74 = vld [vmem:[#allocation2] sm:$0x1]
  %v76 = vperm.slane %v74, 0
  %78 = vmatpush.msra.mxu0 %v73
  %79 = vmatpush.msra.mxu0 %v72
  %80 = vmatpush.msra.mxu0 %v71
  %81 = vmatpush.msra.mxu0 %v70
  %82 = vmatpush.msra.mxu0 %v69
  %83 = vmatpush.msra.mxu0 %v68
  %84 = vmatpush.msra.mxu0 %v67
  %85 = vmatpush.msra.mxu0 %v66
  %86 = vmatpush.msra.mxu0 %v65
  %87 = vmatpush.msra.mxu0 %v64
  %88 = vmatpush.msra.mxu0 %v63
  %89 = vmatpush.msra.mxu0 %v62
  %90 = vmatpush.msra.mxu0 %v61
  %91 = vmatpush.msra.mxu0 %v60
  %92 = vmatpush.msra.mxu0 %v59
  %93 = vmatpush.msra.mxu0 %v58
  %94 = vmatmul.f32.gmra.mxu0 %v57
  %v95 = vpop.f32.mrf.mxu0
  %v96 = vadd.f32 %v76, %v95
  %97 = vdwg.mxu0
  %vm98 = vcmask 7168
  %99 = vst.msk [vmem:[%s5] sm:$0xff] %vm98, %v96
  // Predicated region
  $region22: #{simple_model_forward.1} parent=0 // pred_check
    _
  $region23: #{simple_model_forward.1} parent=0 // pred_check_branch
    %101 = sbr.rel (0) target = $region25
  $region24: #{simple_model_forward.1} parent=0 // pred_region
    _
  $region25: #{simple_model_forward.1} parent=0 // pred_fallthru
    _
  // Predicated region
  $region26: #{simple_model_forward.1} parent=0 // pred_check
    _
  $region27: #{simple_model_forward.1} parent=0 // pred_check_branch
    %103 = sbr.rel (0) target = $region29
  $region28: #{simple_model_forward.1} parent=0 // pred_region
    _
  $region29: #{simple_model_forward.1} parent=0 // pred_fallthru
    _

</llo_original>
